<compile_context>
chip_gen: v7x
topology: tpu7x:2x2x1
jax: 0.10.0
libtpu: 0.0.40
codegen_flags: <defaults>
</compile_context>

<pallas_src>
import math

import numpy as np
import jax
import jax.numpy as jnp
from jax.experimental import pallas as pl
from jax.experimental.pallas import tpu as pltpu

_MXU_DTYPE = jnp.bfloat16          # MXU operand dtype (accumulation stays f32)
_MASK_NEG = -1e30                  # softmax key-padding mask value
_OT_NEG = -1e9                     # Sinkhorn padding fill (stays finite in LSE)
_VMEM_LIMIT = 48 * 1024 * 1024     # <= v7x 64 MiB physical; fine on v5e/v6e


def _round_up(x, m):
    return ((x + m - 1) // m) * m


def _pick_tiles(n_max):
    """Common padded keypoint count Np (multiple of the query tile) and TQ."""
    n8 = _round_up(max(n_max, 8), 8)
    if n8 <= 256:
        return n8, n8
    tq = 256
    return _round_up(n8, tq), tq


def _pad_rows(x, n):
    p = n - x.shape[1]
    if p <= 0:
        return x
    widths = [(0, 0)] * x.ndim
    widths[1] = (0, p)
    return jnp.pad(x, widths)


def _mm(a, b):
    """a @ b on the MXU, bf16 operands, f32 accumulation."""
    return jnp.dot(a.astype(_MXU_DTYPE), b.astype(_MXU_DTYPE),
                   preferred_element_type=jnp.float32)


def _mm_t(a, b):
    """a @ b.T on the MXU, bf16 operands, f32 accumulation."""
    return jax.lax.dot_general(a.astype(_MXU_DTYPE), b.astype(_MXU_DTYPE),
                               (((1,), (1,)), ((), ())),
                               preferred_element_type=jnp.float32)


# -----------------------------------------------------------------------------
# Kernel 1: keypoint encoder MLP (BN folded) + residual add, row-tiled
# -----------------------------------------------------------------------------
def _kenc_kernel(n_layers):
    def kernel(*refs):
        feat_ref, desc_ref = refs[0], refs[1]
        out_ref = refs[-1]
        wb = refs[2:-1]                          # w0, b0, w1, b1, ...
        f = feat_ref[0, 0]                       # (TQ, 3) f32
        w0 = wb[0][...]                          # (3, C0) f32, BN folded
        b0 = wb[1][...]                          # (1, C0)
        # First 3->C layer on the VPU: three broadcast FMAs instead of a K=3
        # MXU matmul on a 98%-lane-wasted operand.
        x = (f[:, 0:1] * w0[0:1, :] + f[:, 1:2] * w0[1:2, :]
             + f[:, 2:3] * w0[2:3, :]) + b0
        x = jnp.maximum(x, 0.0)
        for i in range(1, n_layers):
            x = _mm(x, wb[2 * i][...]) + wb[2 * i + 1][...]
            if i < n_layers - 1:
                x = jnp.maximum(x, 0.0)
        out_ref[0, 0] = desc_ref[0, 0] + x       # residual add to descriptors
    return kernel


def kenc_add(kenc_params, feat_st, desc_st, tq):
    """feat_st (B,2,Np,3), desc_st (B,2,Np,F)  ->  desc + MLP([kpts, score])."""
    B, S, Np, F = desc_st.shape
    nqt = Np // tq
    flat = []
    for w, b in kenc_params:
        flat += [w, b]
    blk = lambda c: pl.BlockSpec((1, 1, tq, c), lambda b, s, t: (b, s, t, 0))
    wspec = lambda a: pl.BlockSpec(a.shape, lambda b, s, t: (0,) * a.ndim)
    out = pl.pallas_call(
        _kenc_kernel(len(kenc_params)),
        out_shape=jax.ShapeDtypeStruct((B, S, Np, F), jnp.float32),
        grid=(B, S, nqt),
        in_specs=[blk(3), blk(F)] + [wspec(a) for a in flat],
        out_specs=blk(F),
        compiler_params=pltpu.CompilerParams(
            dimension_semantics=("parallel", "parallel", "parallel"),
            vmem_limit_bytes=_VMEM_LIMIT),
    )(feat_st, desc_st, *flat)
    return out


# -----------------------------------------------------------------------------
# Kernel 2: one AttentionalPropagation layer, query-tiled, set axis in the grid
# -----------------------------------------------------------------------------
def _gnn_layer_kernel(num_heads, head_dim, feat_dim, n_src):
    F = feat_dim
    D = head_dim

    def kernel(len_ref, x_ref, src_ref,
               wq_ref, bq_ref, wkv_ref, bkv_ref, wm_ref, bm_ref,
               w1_ref, b1_ref, w2_ref, b2_ref,
               o_ref, kv_ref, oh_ref):
        s_idx = pl.program_id(1)
        q_idx = pl.program_id(2)

        # K/V projection of the FULL source set, computed once per (batch, set)
        # and cached (bf16) in VMEM scratch across the query-tile axis.
        @pl.when(q_idx == 0)
        def _():
            kv = _mm(src_ref[0, 0], wkv_ref[...]) + bkv_ref[...]   # (Ns, 2F)
            kv_ref[...] = kv.astype(_MXU_DTYPE)

        x = x_ref[0, 0]                                  # (TQ, F) f32 (residual)
        xb = x.astype(_MXU_DTYPE)
        q = _mm(xb, wq_ref[...]) + bq_ref[...]           # 1/sqrt(D) folded in wq
        qb = q.astype(_MXU_DTYPE)

        # Key-padding mask for the stacked/padded source set.
        src_len = len_ref[s_idx]
        col = jax.lax.broadcasted_iota(jnp.int32, (1, n_src), 1)
        valid = col < src_len                            # (1, Ns)

        # Per-head attention; head outputs written at their head offset into a
        # (TQ, F) scratch so the merge is ONE K=F matmul.
        for h in range(num_heads):
            lo = h * D
            s = _mm_t(qb[:, lo:lo + D], kv_ref[:, lo:lo + D])      # (TQ, Ns)
            s = jnp.where(valid, s, _MASK_NEG)
            s = s - jnp.max(s, axis=-1, keepdims=True)
            p = jnp.exp(s)
            p = p * pl.reciprocal(jnp.sum(p, axis=-1, keepdims=True), approx=True)
            o_h = _mm(p, kv_ref[:, F + lo:F + lo + D])             # (TQ, D)
            oh_ref[:, lo:lo + D] = o_h.astype(_MXU_DTYPE)

        msg = _mm(oh_ref[...], wm_ref[...]) + bm_ref[...]          # (TQ, F)

        # MLP([2F, 2F, F]) on concat([x, msg]) without materializing the concat.
        h1 = _mm(xb, w1_ref[:F, :]) + _mm(msg, w1_ref[F:, :]) + b1_ref[...]
        h1 = jnp.maximum(h1, 0.0)
        delta = _mm(h1, w2_ref[...]) + b2_ref[...]
        o_ref[0, 0] = x + delta                                    # residual
    return kernel


def gnn_layer(desc_st, src_st, src_len, lp, num_heads, head_dim, tq):
    B, S, Np, F = desc_st.shape
    nqt = Np // tq
    x_spec = pl.BlockSpec((1, 1, tq, F), lambda b, s, q: (b, s, q, 0))
    src_spec = pl.BlockSpec((1, 1, Np, F), lambda b, s, q: (b, s, 0, 0))
    wspec = lambda a: pl.BlockSpec(a.shape, lambda b, s, q: (0,) * a.ndim)
    smem_spec = pl.BlockSpec(memory_space=pltpu.MemorySpace.SMEM)
    return pl.pallas_call(
        _gnn_layer_kernel(num_heads, head_dim, F, Np),
        out_shape=jax.ShapeDtypeStruct((B, S, Np, F), jnp.float32),
        grid=(B, S, nqt),
        in_specs=[smem_spec, x_spec, src_spec,
                  wspec(lp['wq']), wspec(lp['bq']),
                  wspec(lp['wkv']), wspec(lp['bkv']),
                  wspec(lp['wm']), wspec(lp['bm']),
                  wspec(lp['w1']), wspec(lp['b1']),
                  wspec(lp['w2']), wspec(lp['b2'])],
        out_specs=x_spec,
        scratch_shapes=[pltpu.VMEM((Np, 2 * F), _MXU_DTYPE),   # cached K/V
                        pltpu.VMEM((tq, F), _MXU_DTYPE)],      # head outputs
        compiler_params=pltpu.CompilerParams(
            dimension_semantics=("parallel", "parallel", "arbitrary"),
            vmem_limit_bytes=_VMEM_LIMIT),
    )(src_len, desc_st, src_st,
      lp['wq'], lp['bq'], lp['wkv'], lp['bkv'], lp['wm'], lp['bm'],
      lp['w1'], lp['b1'], lp['w2'], lp['b2'])


# -----------------------------------------------------------------------------
# Kernel 3: final projection + scores + coupling construction + Sinkhorn, fused
# -----------------------------------------------------------------------------
def _ot_kernel(iters, n0, n1, zr, zc, norm):
    def kernel(alpha_ref, d0_ref, d1_ref, wf_ref, bf_ref,
               logmu_ref, lognu_ref, out_ref, z_ref):
        wf, bf = wf_ref[...], bf_ref[...]
        # Final projection (F**-0.25 folded into wf/bf on both sides) + scores.
        m0 = _mm(d0_ref[0], wf) + bf                 # (ZR, F)
        m1 = _mm(d1_ref[0], wf) + bf                 # (ZC, F)
        scores = _mm_t(m0, m1)                       # (ZR, ZC), lane-dense
        alpha = alpha_ref[0]
        # Build the padded coupling matrix in ONE masked pass (no full alpha
        # fill + overwrite): interior = scores, dustbin row/col = alpha,
        # padding = large-negative (kept finite so the log-space LSE is exact).
        row = jax.lax.broadcasted_iota(jnp.int32, (zr, zc), 0)
        col = jax.lax.broadcasted_iota(jnp.int32, (zr, zc), 1)
        in_sc = (row < n0) & (col < n1)
        is_bin = ((row == n0) & (col <= n1)) | ((col == n1) & (row <= n0))
        z_ref[...] = jnp.where(in_sc, scores,
                               jnp.where(is_bin, alpha, _OT_NEG))
        Z = z_ref[...]
        log_mu = logmu_ref[...]                      # (ZR, 1), padding = _OT_NEG
        log_nu = lognu_ref[...]                      # (1, ZC), padding = _OT_NEG

        def lse(x, axis):
            mx = jnp.max(x, axis=axis, keepdims=True)
            return mx + jnp.log(jnp.sum(jnp.exp(x - mx), axis=axis,
                                        keepdims=True))

        def body(_, carry):
            u, v = carry
            u = log_mu - lse(Z + v, 1)
            v = log_nu - lse(Z + u, 0)
            return (u, v)

        u0 = jnp.zeros((zr, 1), jnp.float32)
        v0 = jnp.zeros((1, zc), jnp.float32)
        u, v = jax.lax.fori_loop(0, iters, body, (u0, v0))
        out_ref[0] = Z + u + v - norm
    return kernel


def optimal_transport_scores(desc0, desc1, n0, n1, wf, bf, alpha, iters):
    B, _, F = desc0.shape
    zr = _round_up(n0 + 1, 8)         # sublane-aligned
    zc = _round_up(n1 + 1, 128)       # lane-dense coupling matrix
    d0 = _pad_rows(desc0[:, :n0], zr).astype(_MXU_DTYPE)
    d1 = _pad_rows(desc1[:, :n1], zc).astype(_MXU_DTYPE)
    norm = -math.log(n0 + n1)
    log_mu = np.full((zr, 1), _OT_NEG, np.float32)
    log_mu[:n0, 0] = norm
    log_mu[n0, 0] = math.log(n1) + norm
    log_nu = np.full((1, zc), _OT_NEG, np.float32)
    log_nu[0, :n1] = norm
    log_nu[0, n1] = math.log(n0) + norm
    padded = pl.pallas_call(
        _ot_kernel(iters, n0, n1, zr, zc, norm),
        out_shape=jax.ShapeDtypeStruct((B, zr, zc), jnp.float32),
        grid=(B,),
        in_specs=[
            pl.BlockSpec(memory_space=pltpu.MemorySpace.SMEM),   # alpha scalar
            pl.BlockSpec((1, zr, F), lambda b: (b, 0, 0)),
            pl.BlockSpec((1, zc, F), lambda b: (b, 0, 0)),
            pl.BlockSpec(wf.shape, lambda b: (0, 0)),
            pl.BlockSpec(bf.shape, lambda b: (0, 0)),
            pl.BlockSpec((zr, 1), lambda b: (0, 0)),
            pl.BlockSpec((1, zc), lambda b: (0, 0)),
        ],
        out_specs=pl.BlockSpec((1, zr, zc), lambda b: (b, 0, 0)),
        scratch_shapes=[pltpu.VMEM((zr, zc), jnp.float32)],
        compiler_params=pltpu.CompilerParams(
            dimension_semantics=("parallel",),
            vmem_limit_bytes=_VMEM_LIMIT),
    )(alpha, d0, d1, wf, bf, jnp.asarray(log_mu), jnp.asarray(log_nu))
    return padded[:, :n0 + 1, :n1 + 1]


# -----------------------------------------------------------------------------
# Plain-JAX glue (keypoint normalization, mutual-match extraction)
# -----------------------------------------------------------------------------
def normalize_keypoints(kpts, image_shape):
    height, width = image_shape
    size = jnp.array([[float(width), float(height)]], jnp.float32)    # (1, 2)
    center = size / 2
    scaling = jnp.max(size, axis=1, keepdims=True) * 0.7              # (1, 1)
    return (kpts - center[:, None, :]) / scaling[:, None, :]


def extract_matches(scores, match_threshold):
    sub = scores[:, :-1, :-1]
    max0_vals = jnp.max(sub, axis=2)
    indices0 = jnp.argmax(sub, axis=2).astype(jnp.int32)
    indices1 = jnp.argmax(sub, axis=1).astype(jnp.int32)
    m, n = sub.shape[1], sub.shape[2]
    ar0 = jnp.arange(m, dtype=jnp.int32)[None]
    ar1 = jnp.arange(n, dtype=jnp.int32)[None]
    mutual0 = ar0 == jnp.take_along_axis(indices1, indices0, axis=1)
    mutual1 = ar1 == jnp.take_along_axis(indices0, indices1, axis=1)
    zero = jnp.float32(0.0)
    mscores0 = jnp.where(mutual0, jnp.exp(max0_vals), zero)
    mscores1 = jnp.where(mutual1,
                         jnp.take_along_axis(mscores0, indices1, axis=1), zero)
    valid0 = mutual0 & (mscores0 > match_threshold)
    valid1 = mutual1 & jnp.take_along_axis(valid0, indices1, axis=1)
    matches0 = jnp.where(valid0, indices0, -1)
    matches1 = jnp.where(valid1, indices1, -1)
    return {'matches0': matches0, 'matches1': matches1,
            'matching_scores0': mscores0, 'matching_scores1': mscores1}


def superglue_forward(prepared, data, *, layer_names, num_heads=4,
                      descriptor_dim=32, sinkhorn_iters=20,
                      match_threshold=0.2):
    F = descriptor_dim
    head_dim = F // num_heads
    # channels-last layout (B, N, F): channel dim on the lane axis
    desc0 = jnp.transpose(data['descriptors0'], (0, 2, 1))
    desc1 = jnp.transpose(data['descriptors1'], (0, 2, 1))
    B, N0, _ = desc0.shape
    N1 = desc1.shape[1]
    kpts0 = normalize_keypoints(data['keypoints0'], data['image_size0'])
    kpts1 = normalize_keypoints(data['keypoints1'], data['image_size1'])
    feat0 = jnp.concatenate([kpts0, data['scores0'][..., None]], axis=-1)
    feat1 = jnp.concatenate([kpts1, data['scores1'][..., None]], axis=-1)

    # Pad both sets to a common, tile-friendly length and stack them on a size-2
    # "set" axis so every kernel gets 2*B parallel grid steps (v7x megacore).
    n_pad, tq = _pick_tiles(max(N0, N1))
    feat_st = jnp.stack([_pad_rows(feat0, n_pad), _pad_rows(feat1, n_pad)], 1)
    desc_st = jnp.stack([_pad_rows(desc0, n_pad), _pad_rows(desc1, n_pad)], 1)

    desc_st = kenc_add(prepared['kenc'], feat_st, desc_st, tq)

    for lp, name in zip(prepared['gnn'], layer_names):
        if name == 'cross':
            src_st = jnp.flip(desc_st, axis=1)
            src_len = jnp.array([N1, N0], jnp.int32)
        else:
            src_st = desc_st
            src_len = jnp.array([N0, N1], jnp.int32)
        desc_st = gnn_layer(desc_st, src_st, src_len, lp, num_heads,
                            head_dim, tq)

    scores = optimal_transport_scores(desc_st[:, 0], desc_st[:, 1], N0, N1,
                                      prepared['final_w'], prepared['final_b'],
                                      prepared['bin_score'], sinkhorn_iters)
    return extract_matches(scores, match_threshold)


# -----------------------------------------------------------------------------
# Deterministic parameter initialization (mirrors the PyTorch module structure)
# -----------------------------------------------------------------------------
def init_conv_params(key, cout, cin, zero_bias=False):
    kw, kb = jax.random.split(key)
    w = jax.random.normal(kw, (cout, cin), jnp.float32) / math.sqrt(cin)
    if zero_bias:
        b = jnp.zeros((cout,), jnp.float32)
    else:
        b = 0.1 * jax.random.normal(kb, (cout,), jnp.float32)
    return {'w': w, 'b': b}


def init_mlp_params(key, channels):
    n = len(channels)
    keys = jax.random.split(key, n - 1)
    layers = []
    for i in range(1, n):
        last = i == n - 1
        p = init_conv_params(keys[i - 1], channels[i], channels[i - 1],
                             zero_bias=last)   # mimics nn.init.constant_(bias, 0)
        if not last:
            p['bn_gamma'] = jnp.ones((channels[i],), jnp.float32)
            p['bn_beta'] = jnp.zeros((channels[i],), jnp.float32)
            p['bn_mean'] = jnp.zeros((channels[i],), jnp.float32)
            p['bn_var'] = jnp.ones((channels[i],), jnp.float32)
        layers.append(p)
    return layers


def init_superglue_params(key, feature_dim, ke_layers, layer_names):
    k_kenc, k_gnn, k_final = jax.random.split(key, 3)
    params = {}
    params['kenc'] = init_mlp_params(k_kenc, [3] + ke_layers + [feature_dim])
    gnn = []
    gkeys = jax.random.split(k_gnn, len(layer_names))
    for gk in gkeys:
        k_attn, k_mlp = jax.random.split(gk)
        pkeys = jax.random.split(k_attn, 4)
        attn = {'proj': [init_conv_params(pkeys[i], feature_dim, feature_dim)
                         for i in range(3)],
                'merge': init_conv_params(pkeys[3], feature_dim, feature_dim)}
        mlp = init_mlp_params(k_mlp, [feature_dim * 2, feature_dim * 2,
                                      feature_dim])
        gnn.append({'attn': attn, 'mlp': mlp})
    params['gnn'] = gnn
    params['final'] = init_conv_params(k_final, feature_dim, feature_dim)
    params['bin_score'] = jnp.float32(1.0)
    return params


# -----------------------------------------------------------------------------
# One-time host-side parameter folding / bf16 pre-cast for the fused kernels
# -----------------------------------------------------------------------------
def _fold_bn(p):
    """Eval-mode BatchNorm1d folded into the preceding 1x1 conv."""
    scale = p['bn_gamma'] / jnp.sqrt(p['bn_var'] + 1e-5)
    w = p['w'] * scale[:, None]
    b = scale * (p['b'] - p['bn_mean']) + p['bn_beta']
    return w, b


def _prepare_mlp(layers, first_layer_vpu=False):
    out = []
    n = len(layers)
    for i, p in enumerate(layers):
        if i < n - 1:
            w, b = _fold_bn(p)
        else:
            w, b = p['w'], p['b']
        wt = jnp.transpose(w)                # (cin, cout): kernels compute x @ w
        if not (first_layer_vpu and i == 0):
            wt = wt.astype(_MXU_DTYPE)       # bf16 through HBM/VMEM
        out.append((wt, b.reshape(1, -1)))
    return out


def prepare_params(raw, num_heads, feature_dim):
    head_dim = feature_dim // num_heads
    # PyTorch head layout (d-major, h-minor) -> head-contiguous channel blocks.
    perm = np.arange(feature_dim).reshape(head_dim, num_heads).T.reshape(-1)
    q_scale = 1.0 / math.sqrt(head_dim)      # attention 1/sqrt(D), folded into Q
    pp = {'kenc': _prepare_mlp(raw['kenc'], first_layer_vpu=True)}
    gnn = []
    for layer in raw['gnn']:
        attn = layer['attn']
        wq = attn['proj'][0]['w'][perm, :] * q_scale
        bq = attn['proj'][0]['b'][perm] * q_scale
        wk = attn['proj'][1]['w'][perm, :]
        bk = attn['proj'][1]['b'][perm]
        wv = attn['proj'][2]['w'][perm, :]
        bv = attn['proj'][2]['b'][perm]
        wkv = jnp.concatenate([wk, wv], axis=0)             # fused K/V: (2F, F)
        bkv = jnp.concatenate([bk, bv], axis=0)
        wm = attn['merge']['w'][:, perm]                    # permute merge inputs
        bm = attn['merge']['b']
        mlp = _prepare_mlp(layer['mlp'])
        gnn.append({
            'wq': jnp.transpose(wq).astype(_MXU_DTYPE), 'bq': bq.reshape(1, -1),
            'wkv': jnp.transpose(wkv).astype(_MXU_DTYPE), 'bkv': bkv.reshape(1, -1),
            'wm': jnp.transpose(wm).astype(_MXU_DTYPE), 'bm': bm.reshape(1, -1),
            'w1': mlp[0][0], 'b1': mlp[0][1],
            'w2': mlp[1][0], 'b2': mlp[1][1],
        })
    pp['gnn'] = gnn
    score_scale = feature_dim ** (-0.25)   # applied to both sides -> 1/sqrt(F)
    pp['final_w'] = (jnp.transpose(raw['final']['w'])
                     * score_scale).astype(_MXU_DTYPE)
    pp['final_b'] = (raw['final']['b'] * score_scale).reshape(1, -1)
    pp['bin_score'] = jnp.reshape(raw['bin_score'], (1,)).astype(jnp.float32)
    return pp


# -----------------------------------------------------------------------------
# Main
# -----------------------------------------------------------------------------
if __name__ == "__main__":
    B = 2
    F = 32                    # descriptor_dim (small stand-in for 256)
    N0, N1 = 16, 12           # keypoints per image
    KE_LAYERS = [8, 16, 32]   # keypoint encoder hidden channels
    LAYER_NAMES = ['self', 'cross']
    NUM_HEADS = 4
    H0, W0 = 120.0, 160.0
    H1, W1 = 96.0, 128.0

    root = jax.random.PRNGKey(0)
    kp, kd = jax.random.split(root)
    raw_params = init_superglue_params(kp, F, KE_LAYERS, LAYER_NAMES)
    params = prepare_params(raw_params, NUM_HEADS, F)

    k1, k2, k3, k4, k5, k6 = jax.random.split(kd, 6)
    data = {
        'descriptors0': jax.random.normal(k1, (B, F, N0), jnp.float32),
        'descriptors1': jax.random.normal(k2, (B, F, N1), jnp.float32),
        'keypoints0': jax.random.uniform(k3, (B, N0, 2), jnp.float32,
                                         minval=0.0, maxval=min(H0, W0)),
        'keypoints1': jax.random.uniform(k4, (B, N1, 2), jnp.float32,
                                         minval=0.0, maxval=min(H1, W1)),
        'scores0': jax.random.uniform(k5, (B, N0), jnp.float32),
        'scores1': jax.random.uniform(k6, (B, N1), jnp.float32),
        'image_size0': (H0, W0),
        'image_size1': (H1, W1),
    }

    out = superglue_forward(params, data, layer_names=LAYER_NAMES,
                            num_heads=NUM_HEADS, descriptor_dim=F,
                            sinkhorn_iters=20, match_threshold=0.2)
    out = jax.block_until_ready(out)

    assert out['matches0'].shape == (B, N0)
    assert out['matches1'].shape == (B, N1)
    assert out['matching_scores0'].shape == (B, N0)
    assert out['matching_scores1'].shape == (B, N1)
    print("KERNEL_OK")
</pallas_src>

<mosaic_0001>
module attributes {stable_mosaic.version = 11 : i64} {
  func.func @kernel(%arg0: i32, %arg1: i32, %arg2: i32, %arg3: memref<1x1x16x3xf32, #tpu.memory_space<vmem>>, %arg4: memref<1x1x16x32xf32, #tpu.memory_space<vmem>>, %arg5: memref<3x8xf32, #tpu.memory_space<vmem>>, %arg6: memref<1x8xf32, #tpu.memory_space<vmem>>, %arg7: memref<8x16xbf16, #tpu.memory_space<vmem>>, %arg8: memref<1x16xf32, #tpu.memory_space<vmem>>, %arg9: memref<16x32xbf16, #tpu.memory_space<vmem>>, %arg10: memref<1x32xf32, #tpu.memory_space<vmem>>, %arg11: memref<32x32xbf16, #tpu.memory_space<vmem>>, %arg12: memref<1x32xf32, #tpu.memory_space<vmem>>, %arg13: memref<1x1x16x32xf32, #tpu.memory_space<vmem>>) attributes {dimension_semantics = [#tpu.dimension_semantics<parallel>, #tpu.dimension_semantics<parallel>, #tpu.dimension_semantics<parallel>], iteration_bounds = array<i64: 2, 2, 1>, scalar_prefetch = 0 : i64, scratch_operands = 0 : i64, tpu.core_type = #tpu.core_type<tc>, window_params = [{transform_indices = @transform_0, window_bounds = array<i64: 1, 1, 16, 3>}, {transform_indices = @transform_1, window_bounds = array<i64: 1, 1, 16, 32>}, {pipeline_mode = #tpu.pipeline_mode<synchronous>, transform_indices = @transform_2, window_bounds = array<i64: 3, 8>}, {pipeline_mode = #tpu.pipeline_mode<synchronous>, transform_indices = @transform_3, window_bounds = array<i64: 1, 8>}, {pipeline_mode = #tpu.pipeline_mode<synchronous>, transform_indices = @transform_4, window_bounds = array<i64: 8, 16>}, {pipeline_mode = #tpu.pipeline_mode<synchronous>, transform_indices = @transform_5, window_bounds = array<i64: 1, 16>}, {pipeline_mode = #tpu.pipeline_mode<synchronous>, transform_indices = @transform_6, window_bounds = array<i64: 16, 32>}, {pipeline_mode = #tpu.pipeline_mode<synchronous>, transform_indices = @transform_7, window_bounds = array<i64: 1, 32>}, {pipeline_mode = #tpu.pipeline_mode<synchronous>, transform_indices = @transform_8, window_bounds = array<i64: 32, 32>}, {pipeline_mode = #tpu.pipeline_mode<synchronous>, transform_indices = @transform_9, window_bounds = array<i64: 1, 32>}, {transform_indices = @transform_10, window_bounds = array<i64: 1, 1, 16, 32>}]} {
    %c0 = arith.constant 0 : index
    %c0_0 = arith.constant 0 : index
    %c0_1 = arith.constant 0 : index
    %c0_2 = arith.constant 0 : index
    %0 = vector.load %arg3[%c0, %c0_0, %c0_1, %c0_2] : memref<1x1x16x3xf32, #tpu.memory_space<vmem>>, vector<1x1x16x3xf32>
    %1 = vector.shape_cast %0 : vector<1x1x16x3xf32> to vector<16x3xf32>
    %c0_3 = arith.constant 0 : index
    %c0_4 = arith.constant 0 : index
    %2 = vector.load %arg5[%c0_3, %c0_4] : memref<3x8xf32, #tpu.memory_space<vmem>>, vector<3x8xf32>
    %c0_5 = arith.constant 0 : index
    %c0_6 = arith.constant 0 : index
    %3 = vector.load %arg6[%c0_5, %c0_6] : memref<1x8xf32, #tpu.memory_space<vmem>>, vector<1x8xf32>
    %4 = vector.extract_strided_slice %1 {offsets = [0, 0], sizes = [16, 1], strides = [1, 1]} : vector<16x3xf32> to vector<16x1xf32>
    %5 = vector.extract_strided_slice %2 {offsets = [0, 0], sizes = [1, 8], strides = [1, 1]} : vector<3x8xf32> to vector<1x8xf32>
    %6 = vector.broadcast %4 : vector<16x1xf32> to vector<16x8xf32>
    %7 = vector.broadcast %5 : vector<1x8xf32> to vector<16x8xf32>
    %8 = arith.mulf %6, %7 : vector<16x8xf32>
    %9 = vector.extract_strided_slice %1 {offsets = [0, 1], sizes = [16, 1], strides = [1, 1]} : vector<16x3xf32> to vector<16x1xf32>
    %10 = vector.extract_strided_slice %2 {offsets = [1, 0], sizes = [1, 8], strides = [1, 1]} : vector<3x8xf32> to vector<1x8xf32>
    %11 = vector.broadcast %9 : vector<16x1xf32> to vector<16x8xf32>
    %12 = vector.broadcast %10 : vector<1x8xf32> to vector<16x8xf32>
    %13 = arith.mulf %11, %12 : vector<16x8xf32>
    %14 = arith.addf %8, %13 : vector<16x8xf32>
    %15 = vector.extract_strided_slice %1 {offsets = [0, 2], sizes = [16, 1], strides = [1, 1]} : vector<16x3xf32> to vector<16x1xf32>
    %16 = vector.extract_strided_slice %2 {offsets = [2, 0], sizes = [1, 8], strides = [1, 1]} : vector<3x8xf32> to vector<1x8xf32>
    %17 = vector.broadcast %15 : vector<16x1xf32> to vector<16x8xf32>
    %18 = vector.broadcast %16 : vector<1x8xf32> to vector<16x8xf32>
    %19 = arith.mulf %17, %18 : vector<16x8xf32>
    %20 = arith.addf %14, %19 : vector<16x8xf32>
    %21 = vector.broadcast %3 : vector<1x8xf32> to vector<16x8xf32>
    %22 = arith.addf %20, %21 : vector<16x8xf32>
    %cst = arith.constant 0.000000e+00 : f32
    %23 = vector.broadcast %cst : f32 to vector<16x8xf32>
    %24 = arith.maximumf %22, %23 : vector<16x8xf32>
    %c0_7 = arith.constant 0 : index
    %c0_8 = arith.constant 0 : index
    %25 = vector.load %arg7[%c0_7, %c0_8] : memref<8x16xbf16, #tpu.memory_space<vmem>>, vector<8x16xbf16>
    %26 = arith.truncf %24 : vector<16x8xf32> to vector<16x8xbf16>
    %cst_9 = arith.constant dense<0.000000e+00> : vector<16x16xf32>
    %27 = tpu.matmul %26, %25, %cst_9 {dimension_numbers = #tpu.dot_dimension_numbers<[1], [0], [0], [1], [0, 0, 1, 1], [], []>} : vector<16x8xbf16>, vector<8x16xbf16>, vector<16x16xf32> -> vector<16x16xf32>
    %c0_10 = arith.constant 0 : index
    %c0_11 = arith.constant 0 : index
    %28 = vector.load %arg8[%c0_10, %c0_11] : memref<1x16xf32, #tpu.memory_space<vmem>>, vector<1x16xf32>
    %29 = vector.broadcast %28 : vector<1x16xf32> to vector<16x16xf32>
    %30 = arith.addf %27, %29 : vector<16x16xf32>
    %cst_12 = arith.constant 0.000000e+00 : f32
    %31 = vector.broadcast %cst_12 : f32 to vector<16x16xf32>
    %32 = arith.maximumf %30, %31 : vector<16x16xf32>
    %c0_13 = arith.constant 0 : index
    %c0_14 = arith.constant 0 : index
    %33 = vector.load %arg9[%c0_13, %c0_14] : memref<16x32xbf16, #tpu.memory_space<vmem>>, vector<16x32xbf16>
    %34 = arith.truncf %32 : vector<16x16xf32> to vector<16x16xbf16>
    %cst_15 = arith.constant dense<0.000000e+00> : vector<16x32xf32>
    %35 = tpu.matmul %34, %33, %cst_15 {dimension_numbers = #tpu.dot_dimension_numbers<[1], [0], [0], [1], [0, 0, 1, 1], [], []>} : vector<16x16xbf16>, vector<16x32xbf16>, vector<16x32xf32> -> vector<16x32xf32>
    %c0_16 = arith.constant 0 : index
    %c0_17 = arith.constant 0 : index
    %36 = vector.load %arg10[%c0_16, %c0_17] : memref<1x32xf32, #tpu.memory_space<vmem>>, vector<1x32xf32>
    %37 = vector.broadcast %36 : vector<1x32xf32> to vector<16x32xf32>
    %38 = arith.addf %35, %37 : vector<16x32xf32>
    %cst_18 = arith.constant 0.000000e+00 : f32
    %39 = vector.broadcast %cst_18 : f32 to vector<16x32xf32>
    %40 = arith.maximumf %38, %39 : vector<16x32xf32>
    %c0_19 = arith.constant 0 : index
    %c0_20 = arith.constant 0 : index
    %41 = vector.load %arg11[%c0_19, %c0_20] : memref<32x32xbf16, #tpu.memory_space<vmem>>, vector<32x32xbf16>
    %42 = arith.truncf %40 : vector<16x32xf32> to vector<16x32xbf16>
    %cst_21 = arith.constant dense<0.000000e+00> : vector<16x32xf32>
    %43 = tpu.matmul %42, %41, %cst_21 {dimension_numbers = #tpu.dot_dimension_numbers<[1], [0], [0], [1], [0, 0, 1, 1], [], []>} : vector<16x32xbf16>, vector<32x32xbf16>, vector<16x32xf32> -> vector<16x32xf32>
    %c0_22 = arith.constant 0 : index
    %c0_23 = arith.constant 0 : index
    %44 = vector.load %arg12[%c0_22, %c0_23] : memref<1x32xf32, #tpu.memory_space<vmem>>, vector<1x32xf32>
    %45 = vector.broadcast %44 : vector<1x32xf32> to vector<16x32xf32>
    %46 = arith.addf %43, %45 : vector<16x32xf32>
    %c0_24 = arith.constant 0 : index
    %c0_25 = arith.constant 0 : index
    %c0_26 = arith.constant 0 : index
    %c0_27 = arith.constant 0 : index
    %47 = vector.load %arg4[%c0_24, %c0_25, %c0_26, %c0_27] : memref<1x1x16x32xf32, #tpu.memory_space<vmem>>, vector<1x1x16x32xf32>
    %48 = vector.shape_cast %47 : vector<1x1x16x32xf32> to vector<16x32xf32>
    %49 = arith.addf %48, %46 : vector<16x32xf32>
    %c0_28 = arith.constant 0 : index
    %c0_29 = arith.constant 0 : index
    %c0_30 = arith.constant 0 : index
    %c0_31 = arith.constant 0 : index
    %50 = vector.load %arg13[%c0_28, %c0_29, %c0_30, %c0_31] : memref<1x1x16x32xf32, #tpu.memory_space<vmem>>, vector<1x1x16x32xf32>
    %51 = vector.shape_cast %50 : vector<1x1x16x32xf32> to vector<16x32xf32>
    %52 = vector.shape_cast %49 : vector<16x32xf32> to vector<1x1x16x32xf32>
    tpu.vector_store %arg13[%c0_28, %c0_29, %c0_30, %c0_31], %52 {strides = array<i32>} : memref<1x1x16x32xf32, #tpu.memory_space<vmem>>, vector<1x1x16x32xf32>,
    return
  }
  func.func @transform_0(%arg0: i32, %arg1: i32, %arg2: i32) -> (i32, i32, i32, i32) {
    %c0_i32 = arith.constant 0 : i32
    %c0_i32_0 = arith.constant 0 : i32
    return %arg0, %arg1, %arg2, %c0_i32 : i32, i32, i32, i32
  }
  func.func @transform_1(%arg0: i32, %arg1: i32, %arg2: i32) -> (i32, i32, i32, i32) {
    %c0_i32 = arith.constant 0 : i32
    %c0_i32_0 = arith.constant 0 : i32
    return %arg0, %arg1, %arg2, %c0_i32 : i32, i32, i32, i32
  }
  func.func @transform_2(%arg0: i32, %arg1: i32, %arg2: i32) -> (i32, i32) {
    %c0_i32 = arith.constant 0 : i32
    %c0_i32_0 = arith.constant 0 : i32
    %c0_i32_1 = arith.constant 0 : i32
    return %c0_i32, %c0_i32_0 : i32, i32
  }
  func.func @transform_3(%arg0: i32, %arg1: i32, %arg2: i32) -> (i32, i32) {
    %c0_i32 = arith.constant 0 : i32
    %c0_i32_0 = arith.constant 0 : i32
    %c0_i32_1 = arith.constant 0 : i32
    return %c0_i32, %c0_i32_0 : i32, i32
  }
  func.func @transform_4(%arg0: i32, %arg1: i32, %arg2: i32) -> (i32, i32) {
    %c0_i32 = arith.constant 0 : i32
    %c0_i32_0 = arith.constant 0 : i32
    %c0_i32_1 = arith.constant 0 : i32
    return %c0_i32, %c0_i32_0 : i32, i32
  }
  func.func @transform_5(%arg0: i32, %arg1: i32, %arg2: i32) -> (i32, i32) {
    %c0_i32 = arith.constant 0 : i32
    %c0_i32_0 = arith.constant 0 : i32
    %c0_i32_1 = arith.constant 0 : i32
    return %c0_i32, %c0_i32_0 : i32, i32
  }
  func.func @transform_6(%arg0: i32, %arg1: i32, %arg2: i32) -> (i32, i32) {
    %c0_i32 = arith.constant 0 : i32
    %c0_i32_0 = arith.constant 0 : i32
    %c0_i32_1 = arith.constant 0 : i32
    return %c0_i32, %c0_i32_0 : i32, i32
  }
  func.func @transform_7(%arg0: i32, %arg1: i32, %arg2: i32) -> (i32, i32) {
    %c0_i32 = arith.constant 0 : i32
    %c0_i32_0 = arith.constant 0 : i32
    %c0_i32_1 = arith.constant 0 : i32
    return %c0_i32, %c0_i32_0 : i32, i32
  }
  func.func @transform_8(%arg0: i32, %arg1: i32, %arg2: i32) -> (i32, i32) {
    %c0_i32 = arith.constant 0 : i32
    %c0_i32_0 = arith.constant 0 : i32
    %c0_i32_1 = arith.constant 0 : i32
    return %c0_i32, %c0_i32_0 : i32, i32
  }
  func.func @transform_9(%arg0: i32, %arg1: i32, %arg2: i32) -> (i32, i32) {
    %c0_i32 = arith.constant 0 : i32
    %c0_i32_0 = arith.constant 0 : i32
    %c0_i32_1 = arith.constant 0 : i32
    return %c0_i32, %c0_i32_0 : i32, i32
  }
  func.func @transform_10(%arg0: i32, %arg1: i32, %arg2: i32) -> (i32, i32, i32, i32) {
    %c0_i32 = arith.constant 0 : i32
    %c0_i32_0 = arith.constant 0 : i32
    return %arg0, %arg1, %arg2, %c0_i32 : i32, i32, i32, i32
  }
}

</mosaic_0001>

<llo_original>
// kernel: tpu_custom_call.1
$region0: #{tpu_custom_call.1}
  #allocation0 [shape = 'u32[]', space=smem, size = 0x4, offset = 0x4, fixed_abs, tag = 'smem constant byte address 0x4 - core index']
  #allocation1 [shape = 'u32[144,128]{1,0:T(1,128)}', space=vmem, size = 0x12000, scoped, tag = 'internal scratch']
  %s0 = inlined_call_operand.vmem [shape: f32[2,2,16,3], index: 0, kind: input, shape index: {}]
  %s1 = inlined_call_operand.vmem [shape: f32[2,2,16,32], index: 1, kind: input, shape index: {}]
  %s2 = inlined_call_operand.hbm [shape: f32[3,8], index: 2, kind: input, shape index: {}]
  %s3 = inlined_call_operand.vmem [shape: f32[1,8], index: 3, kind: input, shape index: {}]
  %s4 = inlined_call_operand.hbm [shape: bf16[8,16], index: 4, kind: input, shape index: {}]
  %s5 = inlined_call_operand.vmem [shape: f32[1,16], index: 5, kind: input, shape index: {}]
  %s6 = inlined_call_operand.vmem [shape: bf16[16,32], index: 6, kind: input, shape index: {}]
  %s7 = inlined_call_operand.vmem [shape: f32[1,32], index: 7, kind: input, shape index: {}]
  %s8 = inlined_call_operand.vmem [shape: bf16[32,32], index: 8, kind: input, shape index: {}]
  %s9 = inlined_call_operand.vmem [shape: f32[1,32], index: 9, kind: input, shape index: {}]
  %s10 = inlined_call_operand.hbm [shape: f32[2,2,16,32], index: 10, kind: output, shape index: {}]
  %s11 = sld [smem:[#allocation0]]
  $region81: #{tpu_custom_call.1} parent=0
    _
  %s13 = ssub.s32 1, %s11
  %s14 = scalar_select 0, %s13, %s11
  $region1: #{tpu_custom_call.1} parent=0
    #allocation2 [shape = 'u8[2048]{0}', space=vmem, size = 0x800, scoped, tag = 'input window, operand 2, single buffered']
    #allocation3 [shape = 's32[2]{0}', space=sflag, size = 0x8, scoped, tag = 'scoped memory for tpu_custom_call.1']
    #allocation4 [shape = 's32[2]{0}', space=sflag, size = 0x8, scoped, tag = 'scoped memory for tpu_custom_call.1']
    #allocation5 [shape = 'u8[2048]{0}', space=vmem, size = 0x800, scoped, tag = 'input window, operand 4, single buffered']
    #allocation6 [shape = 's32[1]{0}', space=sflag, size = 0x4, scoped, tag = 'scoped memory for tpu_custom_call.1']
    #allocation7 [shape = 'u8[16384]{0}', space=vmem, size = 0x4000, scoped, tag = 'output window, operand 0']
    %15 = vsyncpa [#allocation3], 0
    %16 = vsyncpa [#allocation6], 0
    %17 = vsyncpa [#allocation4], 0
    %s18 = scalar_lea.sflag [#allocation4], 1
    %19 = vsyncpa %s18, 0
    loop: start=0, step=1, limit=6
    $region2: #{tpu_custom_call.1} parent=1 // loop_pre_header
      _
    $region3: #{tpu_custom_call.1} parent=1 // loop_header
      %s21 = sphi 0, %s25
      %p22 = scmp.ge.s32.totalorder %s21, 6
      %s28 = sphi 0, %s47
      %s29 = sphi 0, %s43
      %s30 = sphi 0, %s39
      %s31 = sphi 0, %s28
      %s32 = sphi 0, %s29
      %s33 = sphi 0, %s30
      %s34 = sphi 0, %s31
      %s35 = sphi 0, %s32
      %s36 = sphi 0, %s33
      %s54 = sphi 0, %s56
      %s57 = sphi 0, %s54
      %s58 = sphi 0, %s57
      %s74 = sphi 0, %s58
      %s84 = sphi 0, %s86
      %s87 = sphi 0, %s84
      %s88 = sphi 0, %s87
      %s104 = sphi 0, %s88
      %s108 = sphi 0, %s108
      %s110 = sphi 0, %s108
      %s111 = sphi 0, %s110
      %s125 = sphi 0, %s111
      %s129 = sphi 0, %s129
      %s131 = sphi 0, %s129
      %s132 = sphi 0, %s131
      %s146 = sphi 0, %s132
      %s150 = sphi 0, %s150
      %s152 = sphi 0, %s150
      %s153 = sphi 0, %s152
      %s167 = sphi 0, %s153
      %s171 = sphi 0, %s171
      %s173 = sphi 0, %s171
      %s174 = sphi 0, %s173
      %s188 = sphi 0, %s174
      %s192 = sphi 0, %s192
      %s194 = sphi 0, %s192
      %s195 = sphi 0, %s194
      %s209 = sphi 0, %s195
      %s213 = sphi 0, %s213
      %s215 = sphi 0, %s213
      %s216 = sphi 0, %s215
      %s230 = sphi 0, %s216
      %s234 = sphi 0, %s234
      %s236 = sphi 0, %s234
      %s237 = sphi 0, %s236
      %s251 = sphi 0, %s237
      %s255 = sphi 0, %s255
      %s257 = sphi 0, %s255
      %s258 = sphi 0, %s257
      %s272 = sphi 0, %s258
      %s282 = sphi 0, %s284
      %s285 = sphi 0, %s282
      %s286 = sphi 0, %s285
      %s302 = sphi 0, %s286
    $region4: #{tpu_custom_call.1} parent=1 // loop_header_branch
      %24 = sbr.rel (%p22) target = $region8
    $region5: #{tpu_custom_call.1} parent=1 // loop_body
      %s26 = ssub.s32 %s21, 1
      %s27 = ssub.s32 %s21, 2
      %s37 = sadd.s32 1, %s30
      %p38 = scmp.ge.s32.totalorder %s37, 1
      %s39 = scalar_select %p38, 0, %s37
      %s40 = sadd.s32 1, %s29
      %s41 = scalar_select %p38, %s40, %s29
      %p42 = scmp.ge.s32.totalorder %s41, 2
      %s43 = scalar_select %p42, 0, %s41
      %s44 = sadd.s32 1, %s28
      %s45 = scalar_select %p42, %s44, %s28
      %p46 = scmp.ge.s32.totalorder %s45, 2
      %s47 = scalar_select %p46, 0, %s45
      %s48 = ssub.s32 %s28, %s47
      %s49 = ssub.s32 %s29, %s43
      %s50 = sor.u32 %s48, %s49
      %s51 = ssub.s32 %s30, %s39
      %s52 = sor.u32 %s50, %s51
      %p53 = scmp.eq.s32.totalorder %s52, 0
      %s55 = sadd.s32 %s54, 1
      %s56 = scalar_select %p53, %s54, %s55
      %p59 = pneg %p53
      %p60 = scmp.eq.s32.totalorder %s21, 3
      %p61 = por %p59, %p60
      %p62 = scmp.ne.s32.totalorder %s54, %s57
      %p63 = scmp.eq.s32.totalorder %s21, 0
      %p64 = por %p62, %p63
      %p65 = scmp.ne.s32.totalorder %s54, %s57
      %p66 = scmp.eq.s32.totalorder %s26, 3
      %p67 = por %p65, %p66
      %p68 = scmp.ne.s32.totalorder %s57, %s58
      %p69 = scmp.eq.s32.totalorder %s26, 0
      %p70 = por %p68, %p69
      %p71 = scmp.ne.s32.totalorder %s57, %s58
      %p72 = scmp.eq.s32.totalorder %s27, 3
      %p73 = por %p71, %p72
      %p75 = scmp.ne.s32.totalorder %s58, %s74
      %p76 = scmp.eq.s32.totalorder %s27, 0
      %p77 = por %p75, %p76
      %s78 = ssub.s32 %s28, %s47
      %s79 = ssub.s32 %s29, %s43
      %s80 = sor.u32 %s78, %s79
      %s81 = ssub.s32 %s30, %s39
      %s82 = sor.u32 %s80, %s81
      %p83 = scmp.eq.s32.totalorder %s82, 0
      %s85 = sadd.s32 %s84, 1
      %s86 = scalar_select %p83, %s84, %s85
      %p89 = pneg %p83
      %p90 = scmp.eq.s32.totalorder %s21, 3
      %p91 = por %p89, %p90
      %p92 = scmp.ne.s32.totalorder %s84, %s87
      %p93 = scmp.eq.s32.totalorder %s21, 0
      %p94 = por %p92, %p93
      %p95 = scmp.ne.s32.totalorder %s84, %s87
      %p96 = scmp.eq.s32.totalorder %s26, 3
      %p97 = por %p95, %p96
      %p98 = scmp.ne.s32.totalorder %s87, %s88
      %p99 = scmp.eq.s32.totalorder %s26, 0
      %p100 = por %p98, %p99
      %p101 = scmp.ne.s32.totalorder %s87, %s88
      %p102 = scmp.eq.s32.totalorder %s27, 3
      %p103 = por %p101, %p102
      %p105 = scmp.ne.s32.totalorder %s88, %s104
      %p106 = scmp.eq.s32.totalorder %s27, 0
      %p107 = por %p105, %p106
      %s109 = sadd.s32 %s108, 1
      %p112 = scmp.eq.s32.totalorder %s21, 3
      %p113 = scmp.ne.s32.totalorder %s108, %s110
      %p114 = scmp.eq.s32.totalorder %s21, 0
      %p115 = por %p113, %p114
      %p116 = scmp.ne.s32.totalorder %s108, %s110
      %p117 = scmp.eq.s32.totalorder %s26, 3
      %p118 = por %p116, %p117
      %p119 = scmp.ne.s32.totalorder %s110, %s111
      %p120 = scmp.eq.s32.totalorder %s26, 0
      %p121 = por %p119, %p120
      %p122 = scmp.ne.s32.totalorder %s110, %s111
      %p123 = scmp.eq.s32.totalorder %s27, 3
      %p124 = por %p122, %p123
      %p126 = scmp.ne.s32.totalorder %s111, %s125
      %p127 = scmp.eq.s32.totalorder %s27, 0
      %p128 = por %p126, %p127
      %s130 = sadd.s32 %s129, 1
      %p133 = scmp.eq.s32.totalorder %s21, 3
      %p134 = scmp.ne.s32.totalorder %s129, %s131
      %p135 = scmp.eq.s32.totalorder %s21, 0
      %p136 = por %p134, %p135
      %p137 = scmp.ne.s32.totalorder %s129, %s131
      %p138 = scmp.eq.s32.totalorder %s26, 3
      %p139 = por %p137, %p138
      %p140 = scmp.ne.s32.totalorder %s131, %s132
      %p141 = scmp.eq.s32.totalorder %s26, 0
      %p142 = por %p140, %p141
      %p143 = scmp.ne.s32.totalorder %s131, %s132
      %p144 = scmp.eq.s32.totalorder %s27, 3
      %p145 = por %p143, %p144
      %p147 = scmp.ne.s32.totalorder %s132, %s146
      %p148 = scmp.eq.s32.totalorder %s27, 0
      %p149 = por %p147, %p148
      %s151 = sadd.s32 %s150, 1
      %p154 = scmp.eq.s32.totalorder %s21, 3
      %p155 = scmp.ne.s32.totalorder %s150, %s152
      %p156 = scmp.eq.s32.totalorder %s21, 0
      %p157 = por %p155, %p156
      %p158 = scmp.ne.s32.totalorder %s150, %s152
      %p159 = scmp.eq.s32.totalorder %s26, 3
      %p160 = por %p158, %p159
      %p161 = scmp.ne.s32.totalorder %s152, %s153
      %p162 = scmp.eq.s32.totalorder %s26, 0
      %p163 = por %p161, %p162
      %p164 = scmp.ne.s32.totalorder %s152, %s153
      %p165 = scmp.eq.s32.totalorder %s27, 3
      %p166 = por %p164, %p165
      %p168 = scmp.ne.s32.totalorder %s153, %s167
      %p169 = scmp.eq.s32.totalorder %s27, 0
      %p170 = por %p168, %p169
      %s172 = sadd.s32 %s171, 1
      %p175 = scmp.eq.s32.totalorder %s21, 3
      %p176 = scmp.ne.s32.totalorder %s171, %s173
      %p177 = scmp.eq.s32.totalorder %s21, 0
      %p178 = por %p176, %p177
      %p179 = scmp.ne.s32.totalorder %s171, %s173
      %p180 = scmp.eq.s32.totalorder %s26, 3
      %p181 = por %p179, %p180
      %p182 = scmp.ne.s32.totalorder %s173, %s174
      %p183 = scmp.eq.s32.totalorder %s26, 0
      %p184 = por %p182, %p183
      %p185 = scmp.ne.s32.totalorder %s173, %s174
      %p186 = scmp.eq.s32.totalorder %s27, 3
      %p187 = por %p185, %p186
      %p189 = scmp.ne.s32.totalorder %s174, %s188
      %p190 = scmp.eq.s32.totalorder %s27, 0
      %p191 = por %p189, %p190
      %s193 = sadd.s32 %s192, 1
      %p196 = scmp.eq.s32.totalorder %s21, 3
      %p197 = scmp.ne.s32.totalorder %s192, %s194
      %p198 = scmp.eq.s32.totalorder %s21, 0
      %p199 = por %p197, %p198
      %p200 = scmp.ne.s32.totalorder %s192, %s194
      %p201 = scmp.eq.s32.totalorder %s26, 3
      %p202 = por %p200, %p201
      %p203 = scmp.ne.s32.totalorder %s194, %s195
      %p204 = scmp.eq.s32.totalorder %s26, 0
      %p205 = por %p203, %p204
      %p206 = scmp.ne.s32.totalorder %s194, %s195
      %p207 = scmp.eq.s32.totalorder %s27, 3
      %p208 = por %p206, %p207
      %p210 = scmp.ne.s32.totalorder %s195, %s209
      %p211 = scmp.eq.s32.totalorder %s27, 0
      %p212 = por %p210, %p211
      %s214 = sadd.s32 %s213, 1
      %p217 = scmp.eq.s32.totalorder %s21, 3
      %p218 = scmp.ne.s32.totalorder %s213, %s215
      %p219 = scmp.eq.s32.totalorder %s21, 0
      %p220 = por %p218, %p219
      %p221 = scmp.ne.s32.totalorder %s213, %s215
      %p222 = scmp.eq.s32.totalorder %s26, 3
      %p223 = por %p221, %p222
      %p224 = scmp.ne.s32.totalorder %s215, %s216
      %p225 = scmp.eq.s32.totalorder %s26, 0
      %p226 = por %p224, %p225
      %p227 = scmp.ne.s32.totalorder %s215, %s216
      %p228 = scmp.eq.s32.totalorder %s27, 3
      %p229 = por %p227, %p228
      %p231 = scmp.ne.s32.totalorder %s216, %s230
      %p232 = scmp.eq.s32.totalorder %s27, 0
      %p233 = por %p231, %p232
      %s235 = sadd.s32 %s234, 1
      %p238 = scmp.eq.s32.totalorder %s21, 3
      %p239 = scmp.ne.s32.totalorder %s234, %s236
      %p240 = scmp.eq.s32.totalorder %s21, 0
      %p241 = por %p239, %p240
      %p242 = scmp.ne.s32.totalorder %s234, %s236
      %p243 = scmp.eq.s32.totalorder %s26, 3
      %p244 = por %p242, %p243
      %p245 = scmp.ne.s32.totalorder %s236, %s237
      %p246 = scmp.eq.s32.totalorder %s26, 0
      %p247 = por %p245, %p246
      %p248 = scmp.ne.s32.totalorder %s236, %s237
      %p249 = scmp.eq.s32.totalorder %s27, 3
      %p250 = por %p248, %p249
      %p252 = scmp.ne.s32.totalorder %s237, %s251
      %p253 = scmp.eq.s32.totalorder %s27, 0
      %p254 = por %p252, %p253
      %s256 = sadd.s32 %s255, 1
      %p259 = scmp.eq.s32.totalorder %s21, 3
      %p260 = scmp.ne.s32.totalorder %s255, %s257
      %p261 = scmp.eq.s32.totalorder %s21, 0
      %p262 = por %p260, %p261
      %p263 = scmp.ne.s32.totalorder %s255, %s257
      %p264 = scmp.eq.s32.totalorder %s26, 3
      %p265 = por %p263, %p264
      %p266 = scmp.ne.s32.totalorder %s257, %s258
      %p267 = scmp.eq.s32.totalorder %s26, 0
      %p268 = por %p266, %p267
      %p269 = scmp.ne.s32.totalorder %s257, %s258
      %p270 = scmp.eq.s32.totalorder %s27, 3
      %p271 = por %p269, %p270
      %p273 = scmp.ne.s32.totalorder %s258, %s272
      %p274 = scmp.eq.s32.totalorder %s27, 0
      %p275 = por %p273, %p274
      %s276 = ssub.s32 %s28, %s47
      %s277 = ssub.s32 %s29, %s43
      %s278 = sor.u32 %s276, %s277
      %s279 = ssub.s32 %s30, %s39
      %s280 = sor.u32 %s278, %s279
      %p281 = scmp.eq.s32.totalorder %s280, 0
      %s283 = sadd.s32 %s282, 1
      %s284 = scalar_select %p281, %s282, %s283
      %p287 = pneg %p281
      %p288 = scmp.eq.s32.totalorder %s21, 3
      %p289 = por %p287, %p288
      %p290 = scmp.ne.s32.totalorder %s282, %s285
      %p291 = scmp.eq.s32.totalorder %s21, 0
      %p292 = por %p290, %p291
      %p293 = scmp.ne.s32.totalorder %s282, %s285
      %p294 = scmp.eq.s32.totalorder %s26, 3
      %p295 = por %p293, %p294
      %p296 = scmp.ne.s32.totalorder %s285, %s286
      %p297 = scmp.eq.s32.totalorder %s26, 0
      %p298 = por %p296, %p297
      %p299 = scmp.ne.s32.totalorder %s285, %s286
      %p300 = scmp.eq.s32.totalorder %s27, 3
      %p301 = por %p299, %p300
      %p303 = scmp.ne.s32.totalorder %s286, %s302
      %p304 = scmp.eq.s32.totalorder %s27, 0
      %p305 = por %p303, %p304
      %p306 = scmp.le.s32.totalorder 1, %s21
      %p307 = scmp.lt.s32.totalorder %s21, 5
      %p308 = pnand %p306, %p307
      %p309 = pneg %p308
      // Predicated region
      $region9: #{tpu_custom_call.1} parent=5 // pred_check
        _
      $region10: #{tpu_custom_call.1} parent=5 // pred_check_branch
        %311 = sbr.rel (%p308) target = $region12
      $region11: #{tpu_custom_call.1} parent=5 // pred_region
        %s312 = ssub.s32 %s21, 1
        // Predicated region
        $region13: #{tpu_custom_call.1} parent=11 // pred_check
          %p313 = pneg %p121
        $region14: #{tpu_custom_call.1} parent=11 // pred_check_branch
          %315 = sbr.rel (%p313) target = $region16
        $region15: #{tpu_custom_call.1} parent=11 // pred_region
          %s317 = ssub.s32 64, 64
          %318 = vsyncadd [#allocation3], %s317
          %s320 = sshll.u32 [#allocation2], 4
          %s321 = int_to_ptr.vmem [resolvable:$true] %s320
          %323 = dma.hbm_to_vmem [thread:$0]  %s2, 64, %s321, [#allocation3]
        $region16: #{tpu_custom_call.1} parent=11 // pred_fallthru
          _
        // Predicated region
        $region17: #{tpu_custom_call.1} parent=11 // pred_check
          %p324 = pneg %p142
        $region18: #{tpu_custom_call.1} parent=11 // pred_check_branch
          %326 = sbr.rel (%p324) target = $region20
        $region19: #{tpu_custom_call.1} parent=11 // pred_region
          _
        $region20: #{tpu_custom_call.1} parent=11 // pred_fallthru
          _
        // Predicated region
        $region21: #{tpu_custom_call.1} parent=11 // pred_check
          %p327 = pneg %p163
        $region22: #{tpu_custom_call.1} parent=11 // pred_check_branch
          %329 = sbr.rel (%p327) target = $region24
        $region23: #{tpu_custom_call.1} parent=11 // pred_region
          %s331 = ssub.s32 64, 64
          %332 = vsyncadd [#allocation6], %s331
          %s334 = sshll.u32 [#allocation5], 4
          %s335 = int_to_ptr.vmem [resolvable:$true] %s334
          %337 = dma.hbm_to_vmem [thread:$0]  %s4, 64, %s335, [#allocation6]
        $region24: #{tpu_custom_call.1} parent=11 // pred_fallthru
          _
        // Predicated region
        $region25: #{tpu_custom_call.1} parent=11 // pred_check
          %p338 = pneg %p184
        $region26: #{tpu_custom_call.1} parent=11 // pred_check_branch
          %340 = sbr.rel (%p338) target = $region28
        $region27: #{tpu_custom_call.1} parent=11 // pred_region
          _
        $region28: #{tpu_custom_call.1} parent=11 // pred_fallthru
          _
        // Predicated region
        $region29: #{tpu_custom_call.1} parent=11 // pred_check
          %p341 = pneg %p205
        $region30: #{tpu_custom_call.1} parent=11 // pred_check_branch
          %343 = sbr.rel (%p341) target = $region32
        $region31: #{tpu_custom_call.1} parent=11 // pred_region
          _
        $region32: #{tpu_custom_call.1} parent=11 // pred_fallthru
          _
        // Predicated region
        $region33: #{tpu_custom_call.1} parent=11 // pred_check
          %p344 = pneg %p226
        $region34: #{tpu_custom_call.1} parent=11 // pred_check_branch
          %346 = sbr.rel (%p344) target = $region36
        $region35: #{tpu_custom_call.1} parent=11 // pred_region
          _
        $region36: #{tpu_custom_call.1} parent=11 // pred_fallthru
          _
        // Predicated region
        $region37: #{tpu_custom_call.1} parent=11 // pred_check
          %p347 = pneg %p247
        $region38: #{tpu_custom_call.1} parent=11 // pred_check_branch
          %349 = sbr.rel (%p347) target = $region40
        $region39: #{tpu_custom_call.1} parent=11 // pred_region
          _
        $region40: #{tpu_custom_call.1} parent=11 // pred_fallthru
          _
        // Predicated region
        $region41: #{tpu_custom_call.1} parent=11 // pred_check
          %p350 = pneg %p268
        $region42: #{tpu_custom_call.1} parent=11 // pred_check_branch
          %352 = sbr.rel (%p350) target = $region44
        $region43: #{tpu_custom_call.1} parent=11 // pred_region
          _
        $region44: #{tpu_custom_call.1} parent=11 // pred_fallthru
          _
      $region12: #{tpu_custom_call.1} parent=5 // pred_fallthru
        _
      %p353 = scmp.lt.s32.totalorder %s21, 4
      // Predicated region
      $region45: #{tpu_custom_call.1} parent=5 // pred_check
        %p354 = pneg %p353
      $region46: #{tpu_custom_call.1} parent=5 // pred_check_branch
        %356 = sbr.rel (%p354) target = $region48
      $region47: #{tpu_custom_call.1} parent=5 // pred_region
        // Predicated region
        $region49: #{tpu_custom_call.1} parent=47 // pred_check
          %p357 = pneg %p64
        $region50: #{tpu_custom_call.1} parent=47 // pred_check_branch
          %359 = sbr.rel (%p357) target = $region52
        $region51: #{tpu_custom_call.1} parent=47 // pred_region
          %s360 = smul.u32 2, %s30
          %p361 = scmp.lt.s32.totalorder %s28, 1
          %s362 = scalar_select %p361, %s28, 1
          %p363 = scmp.lt.s32.totalorder %s29, 1
          %s364 = scalar_select %p363, %s29, 1
          %p365 = scmp.lt.s32.totalorder %s360, 1
          %s366 = scalar_select %p365, %s360, 1
          %s367 = smul.addr %s364, 2
          %s368 = sadd.s32 %s366, %s367
          %s369 = smul.addr %s362, 4
          %s370 = sadd.s32 %s368, %s369
          %s371 = smul.addr %s370, 8
          %s372 = scalar_lea.vmem %s0, %s371
          %s373 = smul.u32 2, %s30
        $region52: #{tpu_custom_call.1} parent=47 // pred_fallthru
          _
        // Predicated region
        $region53: #{tpu_custom_call.1} parent=47 // pred_check
          %p374 = pneg %p94
        $region54: #{tpu_custom_call.1} parent=47 // pred_check_branch
          %376 = sbr.rel (%p374) target = $region56
        $region55: #{tpu_custom_call.1} parent=47 // pred_region
          %s377 = smul.u32 2, %s30
          %p378 = scmp.lt.s32.totalorder %s28, 1
          %s379 = scalar_select %p378, %s28, 1
          %p380 = scmp.lt.s32.totalorder %s29, 1
          %s381 = scalar_select %p380, %s29, 1
          %p382 = scmp.lt.s32.totalorder %s377, 1
          %s383 = scalar_select %p382, %s377, 1
          %s384 = smul.addr %s381, 2
          %s385 = sadd.s32 %s383, %s384
          %s386 = smul.addr %s379, 4
          %s387 = sadd.s32 %s385, %s386
          %s388 = smul.addr %s387, 8
          %s389 = scalar_lea.vmem %s1, %s388
          %s390 = smul.u32 2, %s30
        $region56: #{tpu_custom_call.1} parent=47 // pred_fallthru
          _
      $region48: #{tpu_custom_call.1} parent=5 // pred_fallthru
        _
      %p391 = scmp.le.s32.totalorder 1, %s21
      %p392 = scmp.lt.s32.totalorder %s21, 5
      %p393 = pnand %p391, %p392
      %p394 = pneg %p393
      // Predicated region
      $region57: #{tpu_custom_call.1} parent=5 // pred_check
        _
      $region58: #{tpu_custom_call.1} parent=5 // pred_check_branch
        %396 = sbr.rel (%p393) target = $region60
      $region59: #{tpu_custom_call.1} parent=5 // pred_region
        %s397 = ssub.s32 %s21, 1
        // Predicated region
        $region61: #{tpu_custom_call.1} parent=59 // pred_check
          %p398 = pneg %p121
        $region62: #{tpu_custom_call.1} parent=59 // pred_check_branch
          %400 = sbr.rel (%p398) target = $region64
        $region63: #{tpu_custom_call.1} parent=59 // pred_region
          %401 = dma.done [#allocation3], 64
        $region64: #{tpu_custom_call.1} parent=59 // pred_fallthru
          _
        // Predicated region
        $region65: #{tpu_custom_call.1} parent=59 // pred_check
          %p402 = pneg %p163
        $region66: #{tpu_custom_call.1} parent=59 // pred_check_branch
          %404 = sbr.rel (%p402) target = $region68
        $region67: #{tpu_custom_call.1} parent=59 // pred_region
          %405 = dma.done [#allocation6], 64
        $region68: #{tpu_custom_call.1} parent=59 // pred_fallthru
          _
        %s406 = smul.u32 2, %s33
        %p407 = scmp.lt.s32.totalorder %s31, 1
        %s408 = scalar_select %p407, %s31, 1
        %p409 = scmp.lt.s32.totalorder %s32, 1
        %s410 = scalar_select %p409, %s32, 1
        %p411 = scmp.lt.s32.totalorder %s406, 1
        %s412 = scalar_select %p411, %s406, 1
        %s413 = smul.addr %s410, 2
        %s414 = sadd.s32 %s412, %s413
        %s415 = smul.addr %s408, 4
        %s416 = sadd.s32 %s414, %s415
        %s417 = smul.addr %s416, 8
        %s418 = scalar_lea.vmem %s0, %s417
        %p419 = pneg %p70
        %p420 = pneg %p67
        %s421 = smul.u32 2, %s33
        %p422 = scmp.lt.s32.totalorder %s31, 1
        %s423 = scalar_select %p422, %s31, 1
        %p424 = scmp.lt.s32.totalorder %s32, 1
        %s425 = scalar_select %p424, %s32, 1
        %p426 = scmp.lt.s32.totalorder %s421, 1
        %s427 = scalar_select %p426, %s421, 1
        %s428 = smul.addr %s425, 2
        %s429 = sadd.s32 %s427, %s428
        %s430 = smul.addr %s423, 4
        %s431 = sadd.s32 %s429, %s430
        %s432 = smul.addr %s431, 8
        %s433 = scalar_lea.vmem %s1, %s432
        %p434 = pneg %p100
        %p435 = pneg %p97
        %p436 = pneg %p121
        %p437 = pneg %p118
        %p438 = pneg %p142
        %p439 = pneg %p139
        %p440 = pneg %p163
        %p441 = pneg %p160
        %p442 = pneg %p184
        %p443 = pneg %p181
        %p444 = pneg %p205
        %p445 = pneg %p202
        %p446 = pneg %p226
        %p447 = pneg %p223
        %p448 = pneg %p247
        %p449 = pneg %p244
        %p450 = pneg %p268
        %p451 = pneg %p265
        %p452 = pneg %p298
        %p453 = pneg %p295
        %s454 = sand.u32 %s285, 1
        %s455 = scalar_lea.sflag [#allocation4], %s454
        %s456 = sand.u32 %s285, 1
        %s457 = smul.addr %s456, 16
        %s458 = scalar_lea.vmem [#allocation7], %s457
        %s459 = smul.u32 2, %s33
        %p460 = scmp.lt.s32.totalorder %s31, 1
        %s461 = scalar_select %p460, %s31, 1
        %p462 = scmp.lt.s32.totalorder %s32, 1
        %s463 = scalar_select %p462, %s32, 1
        %p464 = scmp.lt.s32.totalorder %s459, 1
        %s465 = scalar_select %p464, %s459, 1
        %s466 = smul.addr %s463, 2
        %s467 = sadd.s32 %s465, %s466
        %s468 = smul.addr %s461, 4
        %s469 = sadd.s32 %s467, %s468
        %s470 = smul.addr %s469, 8
        %s471 = scalar_lea.vmem %s0, %s470
        %s472 = smul.u32 2, %s33
        %s473 = smul.u32 2, %s33
        %p474 = scmp.lt.s32.totalorder %s31, 1
        %s475 = scalar_select %p474, %s31, 1
        %p476 = scmp.lt.s32.totalorder %s32, 1
        %s477 = scalar_select %p476, %s32, 1
        %p478 = scmp.lt.s32.totalorder %s473, 1
        %s479 = scalar_select %p478, %s473, 1
        %s480 = smul.addr %s477, 2
        %s481 = sadd.s32 %s479, %s480
        %s482 = smul.addr %s475, 4
        %s483 = sadd.s32 %s481, %s482
        %s484 = smul.addr %s483, 8
        %s485 = scalar_lea.vmem %s1, %s484
        %s486 = smul.u32 2, %s33
        %s487 = smul.u32 2, %s33
        %v489 = vld [vmem:[%s471] sm:$0xff]
        %v490 = vld [vmem:[%s471 + $0x8] sm:$0xff]
        %v491 = vld [vmem:[#allocation2] sm:$0x7]
        %v492 = vld [vmem:[%s3] sm:$0x1]
        %494 = vset.pattern.permute.xlu0 0
        %495 = vperm.xlu0 %494, %v489
        %v496 = vpop.permute.xlu0 %495
        %499 = vset.pattern.permute.xlu0 0
        %500 = vperm.xlu0 %499, %v490
        %v501 = vpop.permute.xlu0 %500
        %v503 = vlaneseq
        %v504 = vshrl.u32 %v503, 7
        %v505 = vsub.s32 0, %v504
        %v506 = vrot.slane %v491, %v505
        %v507 = vmul.f32 %v496, %v506
        %v508 = vmul.f32 %v501, %v506
        %509 = vset.pattern.permute.xlu0 1
        %510 = vperm.xlu0 %509, %v489
        %v511 = vpop.permute.xlu0 %510
        %513 = vset.pattern.permute.xlu0 1
        %514 = vperm.xlu0 %513, %v490
        %v515 = vpop.permute.xlu0 %514
        %v517 = vlaneseq
        %v518 = vshrl.u32 %v517, 7
        %v519 = vsub.s32 1, %v518
        %v520 = vrot.slane %v491, %v519
        %v521 = vmul.f32 %v511, %v520
        %v522 = vmul.f32 %v515, %v520
        %v523 = vadd.f32 %v507, %v521
        %v524 = vadd.f32 %v508, %v522
        %525 = vset.pattern.permute.xlu0 2
        %526 = vperm.xlu0 %525, %v489
        %v527 = vpop.permute.xlu0 %526
        %529 = vset.pattern.permute.xlu0 2
        %530 = vperm.xlu0 %529, %v490
        %v531 = vpop.permute.xlu0 %530
        %v533 = vlaneseq
        %v534 = vshrl.u32 %v533, 7
        %v535 = vsub.s32 2, %v534
        %v536 = vrot.slane %v491, %v535
        %v537 = vmul.f32 %v527, %v536
        %v538 = vmul.f32 %v531, %v536
        %v539 = vadd.f32 %v523, %v537
        %v540 = vadd.f32 %v524, %v538
        %v542 = vlaneseq
        %v543 = vshrl.u32 %v542, 7
        %v544 = vsub.s32 0, %v543
        %v545 = vrot.slane %v492, %v544
        %v547 = vadd.f32 %v539, %v545
        %v548 = vadd.f32 %v540, %v545
        %v549 = vmax.f32 %v547, 0.0
        %v550 = vmax.f32 %v548, 0.0
        %v551 = vld [vmem:[#allocation5] sm:$0xf]
        %v552 = vpack.c.bf16 %v550, %v549
        %v553 = vld [vmem:[%s5] sm:$0x1]
        %v555 = vlaneseq
        %v556 = vshrl.u32 %v555, 7
        %v557 = vsub.s32 0, %v556
        %v558 = vrot.slane %v553, %v557
        %vm560 = vcmask 64512
        %v562 = vsel %vm560, %v552, 0
        %vm564 = vcmask 1043456
        %v566 = vsel %vm564, %v551, 0
        %568 = vmatprep.subr.bf16.mxu0 0
        %569 = vmatpush1.bf16.msra.mxu0 %v566
        %570 = vmatprep.subr.bf16.mxu0 0
        %571 = vmatpush1.bf16.msra.mxu0 0
        %572 = vmatprep.subr.bf16.mxu0 0
        %573 = vmatpush1.bf16.msra.mxu0 0
        %574 = vmatprep.subr.bf16.mxu0 0
        %575 = vmatpush1.bf16.msra.mxu0 0
        %576 = vmatprep.subr.bf16.mxu0 0
        %577 = vmatpush1.bf16.msra.mxu0 0
        %578 = vmatprep.subr.bf16.mxu0 0
        %579 = vmatpush1.bf16.msra.mxu0 0
        %580 = vmatprep.subr.bf16.mxu0 0
        %581 = vmatpush1.bf16.msra.mxu0 0
        %582 = vmatprep.subr.bf16.mxu0 0
        %583 = vmatpush1.bf16.msra.mxu0 0
        %584 = vmatprep.subr.bf16.mxu0 0
        %585 = vmatpush1.bf16.msra.mxu0 0
        %586 = vmatprep.subr.bf16.mxu0 0
        %587 = vmatpush1.bf16.msra.mxu0 0
        %588 = vmatprep.subr.bf16.mxu0 0
        %589 = vmatpush1.bf16.msra.mxu0 0
        %590 = vmatprep.subr.bf16.mxu0 0
        %591 = vmatpush1.bf16.msra.mxu0 0
        %592 = vmatprep.subr.bf16.mxu0 0
        %593 = vmatpush1.bf16.msra.mxu0 0
        %594 = vmatprep.subr.bf16.mxu0 0
        %595 = vmatpush1.bf16.msra.mxu0 0
        %596 = vmatprep.subr.bf16.mxu0 0
        %597 = vmatpush1.bf16.msra.mxu0 0
        %598 = vmatprep.subr.bf16.mxu0 0
        %599 = vmatpush1.bf16.msra.mxu0 0
        %600 = vmatprep.mubr.bf16.mxu0 0
        %601 = vmatmul.mubr.bf16.gmra.mrb[0].mxu0 %v562
        %v602 = vpop.f32.mrb[0].mxu0
        %v603 = vadd.f32 %v558, %v602
        %v604 = vpop.f32.mrb[0].mxu0
        %v605 = vpop.f32.mrb[0].mxu0
        %v606 = vadd.f32 %v558, %v605
        %v607 = vpop.f32.mrb[0].mxu0
        %608 = vdwg.mxu0
        %v609 = vmax.f32 %v603, 0.0
        %v610 = vmax.f32 %v606, 0.0
        %v611 = vld [vmem:[%s6] sm:$0xf]
        %v612 = vld [vmem:[%s6 + $0x4] sm:$0xf]
        %v613 = vpack.c.bf16 %v610, %v609
        %v614 = vld [vmem:[%s7] sm:$0x1]
        %v616 = vlaneseq
        %v617 = vshrl.u32 %v616, 7
        %v618 = vsub.s32 0, %v617
        %v619 = vrot.slane %v614, %v618
        %v623 = vunpack.c.l.b16 %v611
        %v624 = vunpack.c.l.b16 %v612
        %v625 = vpack.c.b16 %v624, %v623
        %vm627 = vcmask 130048
        %v629 = vsel %vm627, %v613, 0
        %631 = vmatprep.subr.bf16.mxu0 0
        %632 = vmatpush1.bf16.msra.mxu0 %v625
        %633 = vmatprep.subr.bf16.mxu0 0
        %634 = vmatpush1.bf16.msra.mxu0 0
        %635 = vmatprep.subr.bf16.mxu0 0
        %636 = vmatpush1.bf16.msra.mxu0 0
        %637 = vmatprep.subr.bf16.mxu0 0
        %638 = vmatpush1.bf16.msra.mxu0 0
        %639 = vmatprep.subr.bf16.mxu0 0
        %640 = vmatpush1.bf16.msra.mxu0 0
        %641 = vmatprep.subr.bf16.mxu0 0
        %642 = vmatpush1.bf16.msra.mxu0 0
        %643 = vmatprep.subr.bf16.mxu0 0
        %644 = vmatpush1.bf16.msra.mxu0 0
        %645 = vmatprep.subr.bf16.mxu0 0
        %646 = vmatpush1.bf16.msra.mxu0 0
        %647 = vmatprep.subr.bf16.mxu0 0
        %648 = vmatpush1.bf16.msra.mxu0 0
        %649 = vmatprep.subr.bf16.mxu0 0
        %650 = vmatpush1.bf16.msra.mxu0 0
        %651 = vmatprep.subr.bf16.mxu0 0
        %652 = vmatpush1.bf16.msra.mxu0 0
        %653 = vmatprep.subr.bf16.mxu0 0
        %654 = vmatpush1.bf16.msra.mxu0 0
        %655 = vmatprep.subr.bf16.mxu0 0
        %656 = vmatpush1.bf16.msra.mxu0 0
        %657 = vmatprep.subr.bf16.mxu0 0
        %658 = vmatpush1.bf16.msra.mxu0 0
        %659 = vmatprep.subr.bf16.mxu0 0
        %660 = vmatpush1.bf16.msra.mxu0 0
        %661 = vmatprep.subr.bf16.mxu0 0
        %662 = vmatpush1.bf16.msra.mxu0 0
        %663 = vmatprep.mubr.bf16.mxu0 0
        %664 = vmatmul.mubr.bf16.gmra.mrb[0].mxu0 %v629
        %v665 = vpop.f32.mrb[0].mxu0
        %v666 = vadd.f32 %v619, %v665
        %v667 = vpop.f32.mrb[0].mxu0
        %v668 = vpop.f32.mrb[0].mxu0
        %v669 = vadd.f32 %v619, %v668
        %v670 = vpop.f32.mrb[0].mxu0
        %671 = vdwg.mxu0
        %v672 = vmax.f32 %v666, 0.0
        %v673 = vmax.f32 %v669, 0.0
        %v674 = vld [vmem:[%s8] sm:$0xf]
        %v675 = vld [vmem:[%s8 + $0x4] sm:$0xf]
        %v676 = vld [vmem:[%s8 + $0x8] sm:$0xf]
        %v677 = vld [vmem:[%s8 + $0xc] sm:$0xf]
        %v678 = vpack.c.bf16 %v673, %v672
        %v679 = vld [vmem:[%s9] sm:$0x1]
        %v681 = vlaneseq
        %v682 = vshrl.u32 %v681, 7
        %v683 = vsub.s32 0, %v682
        %v684 = vrot.slane %v679, %v683
        %v690 = vunpack.c.l.b16 %v674
        %v691 = vunpack.c.l.b16 %v675
        %v692 = vunpack.c.l.b16 %v676
        %v693 = vunpack.c.l.b16 %v677
        %v694 = vpack.c.b16 %v691, %v690
        %v695 = vpack.c.b16 %v693, %v692
        %vm698 = vcmask 261120
        %v700 = vsel %vm698, %v678, 0
        %702 = vmatprep.subr.bf16.mxu0 0
        %703 = vmatpush1.bf16.msra.mxu0 %v694
        %704 = vmatprep.subr.bf16.mxu0 0
        %705 = vmatpush1.bf16.msra.mxu0 %v695
        %706 = vmatprep.subr.bf16.mxu0 0
        %707 = vmatpush1.bf16.msra.mxu0 0
        %708 = vmatprep.subr.bf16.mxu0 0
        %709 = vmatpush1.bf16.msra.mxu0 0
        %710 = vmatprep.subr.bf16.mxu0 0
        %711 = vmatpush1.bf16.msra.mxu0 0
        %712 = vmatprep.subr.bf16.mxu0 0
        %713 = vmatpush1.bf16.msra.mxu0 0
        %714 = vmatprep.subr.bf16.mxu0 0
        %715 = vmatpush1.bf16.msra.mxu0 0
        %716 = vmatprep.subr.bf16.mxu0 0
        %717 = vmatpush1.bf16.msra.mxu0 0
        %718 = vmatprep.subr.bf16.mxu0 0
        %719 = vmatpush1.bf16.msra.mxu0 0
        %720 = vmatprep.subr.bf16.mxu0 0
        %721 = vmatpush1.bf16.msra.mxu0 0
        %722 = vmatprep.subr.bf16.mxu0 0
        %723 = vmatpush1.bf16.msra.mxu0 0
        %724 = vmatprep.subr.bf16.mxu0 0
        %725 = vmatpush1.bf16.msra.mxu0 0
        %726 = vmatprep.subr.bf16.mxu0 0
        %727 = vmatpush1.bf16.msra.mxu0 0
        %728 = vmatprep.subr.bf16.mxu0 0
        %729 = vmatpush1.bf16.msra.mxu0 0
        %730 = vmatprep.subr.bf16.mxu0 0
        %731 = vmatpush1.bf16.msra.mxu0 0
        %732 = vmatprep.subr.bf16.mxu0 0
        %733 = vmatpush1.bf16.msra.mxu0 0
        %734 = vmatprep.mubr.bf16.mxu0 0
        %735 = vmatmul.mubr.bf16.gmra.mrb[0].mxu0 %v700
        %v736 = vpop.f32.mrb[0].mxu0
        %v737 = vadd.f32 %v684, %v736
        %v738 = vpop.f32.mrb[0].mxu0
        %v739 = vpop.f32.mrb[0].mxu0
        %v740 = vadd.f32 %v684, %v739
        %v741 = vpop.f32.mrb[0].mxu0
        %742 = vdwg.mxu0
        %v743 = vld [vmem:[%s485] sm:$0xff]
        %v744 = vld [vmem:[%s485 + $0x8] sm:$0xff]
        %v745 = vadd.f32 %v743, %v737
        %v746 = vadd.f32 %v744, %v740
        %747 = vst.msk [vmem:[%s458] sm:$0xff] %vm698, %v745
        %748 = vst.msk [vmem:[%s458 + $0x8] sm:$0xff] %vm698, %v746
        %s749 = sand.u32 %s285, 1
        %s750 = scalar_lea.sflag [#allocation4], %s749
        %s751 = sand.u32 %s285, 1
        %s752 = smul.addr %s751, 16
        %s753 = scalar_lea.vmem [#allocation7], %s752
        // Predicated region
        $region69: #{tpu_custom_call.1} parent=59 // pred_check
          %p754 = pneg %p295
        $region70: #{tpu_custom_call.1} parent=59 // pred_check_branch
          %756 = sbr.rel (%p754) target = $region72
        $region71: #{tpu_custom_call.1} parent=59 // pred_region
          %s757 = smul.u32 2, %s33
          %s759 = ssub.s32 256, 256
          %760 = vsyncadd %s750, %s759
          %s761 = smul.addr %s32, 2
          %s762 = sadd.s32 %s757, %s761
          %s763 = smul.addr %s31, 4
          %s764 = sadd.s32 %s762, %s763
          %s765 = smul.addr %s764, 128
          %s766 = scalar_lea.hbm %s10, %s765
          %s767 = sshll.u32 %s753, 4
          %s768 = int_to_ptr.vmem [resolvable:$true] %s767
          %773 = dma.vmem_to_hbm [thread:$0]  %s768, 256, %s766, %s750, 128, 128, 8
        $region72: #{tpu_custom_call.1} parent=59 // pred_fallthru
          _
      $region60: #{tpu_custom_call.1} parent=5 // pred_fallthru
        _
      %p774 = scmp.le.s32.totalorder 2, %s21
      // Predicated region
      $region73: #{tpu_custom_call.1} parent=5 // pred_check
        %p775 = pneg %p774
      $region74: #{tpu_custom_call.1} parent=5 // pred_check_branch
        %777 = sbr.rel (%p775) target = $region76
      $region75: #{tpu_custom_call.1} parent=5 // pred_region
        %s778 = ssub.s32 %s21, 2
        // Predicated region
        $region77: #{tpu_custom_call.1} parent=75 // pred_check
          %p779 = pneg %p301
        $region78: #{tpu_custom_call.1} parent=75 // pred_check_branch
          %781 = sbr.rel (%p779) target = $region80
        $region79: #{tpu_custom_call.1} parent=75 // pred_region
          %s782 = sand.u32 %s286, 1
          %s783 = scalar_lea.sflag [#allocation4], %s782
          %s784 = sand.u32 %s286, 1
          %s785 = smul.addr %s784, 16
          %s786 = scalar_lea.vmem [#allocation7], %s785
          %787 = dma.done %s783, 256
        $region80: #{tpu_custom_call.1} parent=75 // pred_fallthru
          _
      $region76: #{tpu_custom_call.1} parent=5 // pred_fallthru
        _
    $region6: #{tpu_custom_call.1} parent=1 // loop_footer
      %s25 = sadd.s32 1, %s21
    $region7: #{tpu_custom_call.1} parent=1 // loop_footer_branch
      %20 = sbr.rel target = $region3
    $region8: #{tpu_custom_call.1} parent=1 // loop_exit
      _
    %788 = vsyncpa [#allocation3], 1
    %s789 = scalar_lea.sflag [#allocation3], 1
    %790 = vsyncpa %s789, 1
    %791 = vsyncpa [#allocation6], 1
    %792 = vsyncpa [#allocation4], 1
    %s793 = scalar_lea.sflag [#allocation4], 1
    %794 = vsyncpa %s793, 1

</llo_original>
